<compile_context>
chip_gen: v6e
topology: v6e:2x2x1
jax: 0.10.0
libtpu: 0.0.40
codegen_flags: <defaults>
</compile_context>

<pallas_src>
import functools

import jax
import jax.numpy as jnp
from jax.experimental import pallas as pl
from jax.experimental.pallas import tpu as pltpu

_LANE = 128
_SUBLANE = 8


def _round_up(x, m):
    return -(-x // m) * m


def _fold_params(s_l, zp_l, s_r, zp_r, s_o, zp_o):
    """Precompute folded constants shared by kernel and reference."""
    s_l, s_r, s_o = float(s_l), float(s_r), float(s_o)
    zp_l, zp_r, zp_o = float(zp_l), float(zp_r), float(zp_o)
    return dict(
        inv_s_l=1.0 / s_l,
        inv_s_r=1.0 / s_r,
        # Zero points folded into the clip bounds: q' = q - zp.
        lo_l=-zp_l, hi_l=255.0 - zp_l,
        lo_r=-zp_r, hi_r=255.0 - zp_r,
        # (q_l - zp_l)*s_l/s_o + (q_r - zp_r)*s_r/s_o == acc / s_o.
        a_l=s_l / s_o, a_r=s_r / s_o,
        lo_o=-zp_o, hi_o=255.0 - zp_o,
        s_o=s_o,
    )


def _quantized_add_kernel(l_ref, r_ref, o_ref, *, inv_s_l, inv_s_r,
                          lo_l, hi_l, lo_r, hi_r, a_l, a_r, lo_o, hi_o, s_o):
    l = l_ref[...]
    r = r_ref[...]

    # Quantize each input to quint8 (simulated; jnp.round = round-half-to-even,
    # matching torch.quantize_per_tensor). Zero point folded into clip bounds.
    q_l = jnp.clip(jnp.round(l * inv_s_l), lo_l, hi_l)
    q_r = jnp.clip(jnp.round(r * inv_s_r), lo_r, hi_r)

    # quantized.add + requantize with folded constants (== acc / s_o).
    scaled = q_l * a_l + q_r * a_r
    q_o = jnp.clip(jnp.round(scaled), lo_o, hi_o)

    # DeQuantize: (q_o_full - zp_o) * s_o == q_o * s_o.
    o_ref[...] = (q_o * s_o).astype(o_ref.dtype)


def quantized_add(left, right, *, s_l, zp_l, s_r, zp_r, s_o, zp_o,
                  target_rows=2048, small_rows=256):
    """Elementwise quantized add; input flattened to a lane-dense (rows, 128) slab."""
    assert left.shape == right.shape
    orig_shape = left.shape
    n = left.size

    rows = pl.cdiv(n, _LANE)
    padded_rows = _round_up(rows, _SUBLANE)
    padded_n = padded_rows * _LANE

    lf = left.reshape(-1).astype(jnp.float32)
    rf = right.reshape(-1).astype(jnp.float32)
    if padded_n != n:
        # Pad only the tail up to the next (8,128) tile; the common path above
        # is a free reshape of the contiguous buffer (no extra HBM traffic).
        lf = jnp.pad(lf, (0, padded_n - n))
        rf = jnp.pad(rf, (0, padded_n - n))
    lf = lf.reshape(padded_rows, _LANE)
    rf = rf.reshape(padded_rows, _LANE)

    if padded_rows <= small_rows:
        # Tiny input: one block; launch overhead dominates anyway.
        tile_rows = padded_rows
    else:
        # >=2 grid steps so the "parallel" axis can shard across v7x's two
        # TensorCores; cap at target_rows (2048x128 f32 = 1 MiB block, ~6 MiB
        # double-buffered VMEM for 3 arrays -> fits every generation's default).
        half = _round_up(pl.cdiv(padded_rows, 2), _SUBLANE)
        tile_rows = min(target_rows, half)
    # Ragged last block allowed: stores are masked to in-bounds lanes.
    grid = (pl.cdiv(padded_rows, tile_rows),)

    kernel = functools.partial(
        _quantized_add_kernel,
        **_fold_params(s_l, zp_l, s_r, zp_r, s_o, zp_o),
    )

    out = pl.pallas_call(
        kernel,
        out_shape=jax.ShapeDtypeStruct((padded_rows, _LANE), jnp.float32),
        grid_spec=pltpu.PrefetchScalarGridSpec(
            num_scalar_prefetch=0,
            grid=grid,
            in_specs=[
                pl.BlockSpec((tile_rows, _LANE), lambda i: (i, 0)),
                pl.BlockSpec((tile_rows, _LANE), lambda i: (i, 0)),
            ],
            out_specs=pl.BlockSpec((tile_rows, _LANE), lambda i: (i, 0)),
        ),
        compiler_params=pltpu.CompilerParams(
            # "parallel" lets v7x shard the row-tile loop across its 2 TensorCores.
            dimension_semantics=("parallel",),
            # Safe on all generations (v5e scoped default is only 16 MiB).
            vmem_limit_bytes=32 << 20,
        ),
        # ~10 VPU ops/elem, 2 f32 reads + 1 f32 write per element; helps XLA
        # schedule around the custom call when embedded in a larger graph.
        cost_estimate=pl.CostEstimate(
            flops=10 * padded_n,
            transcendentals=0,
            bytes_accessed=3 * padded_n * 4,
        ),
    )(lf, rf)

    if padded_n != n:
        out = out.reshape(-1)[:n]
    return out.reshape(orig_shape)


def _reference(left, right, *, s_l, zp_l, s_r, zp_r, s_o, zp_o):
    """Pure-JAX reference using the same folded-constant math as the kernel."""
    c = _fold_params(s_l, zp_l, s_r, zp_r, s_o, zp_o)
    q_l = jnp.clip(jnp.round(left * c["inv_s_l"]), c["lo_l"], c["hi_l"])
    q_r = jnp.clip(jnp.round(right * c["inv_s_r"]), c["lo_r"], c["hi_r"])
    scaled = q_l * c["a_l"] + q_r * c["a_r"]
    q_o = jnp.clip(jnp.round(scaled), c["lo_o"], c["hi_o"])
    return q_o * c["s_o"]


if __name__ == "__main__":
    # Deterministic quantization params (module __init__ args).
    s_l, zp_l = 0.05, 128   # left_quantization
    s_r, zp_r = 0.04, 120   # right_quantization
    s_o, zp_o = 0.08, 127   # output scale / zero_point

    key = jax.random.PRNGKey(0)
    k1, k2 = jax.random.split(key)
    x_shape = (2, 4, 16, 16)  # NCHW
    left = jax.random.uniform(k1, x_shape, jnp.float32, minval=-3.0, maxval=3.0)
    right = jax.random.uniform(k2, x_shape, jnp.float32, minval=-3.0, maxval=3.0)

    out = quantized_add(left, right,
                        s_l=s_l, zp_l=zp_l, s_r=s_r, zp_r=zp_r,
                        s_o=s_o, zp_o=zp_o)
    out = jax.block_until_ready(out)

    ref = _reference(left, right,
                     s_l=s_l, zp_l=zp_l, s_r=s_r, zp_r=zp_r,
                     s_o=s_o, zp_o=zp_o)
    assert out.shape == x_shape and out.dtype == jnp.float32

    # Quantized outputs are multiples of s_o; allow at most one output
    # quantization step of disagreement (round-half boundary / FMA reassociation).
    max_err = float(jnp.max(jnp.abs(out - ref)))
    assert max_err <= s_o + 1e-5, f"mismatch vs reference: max err {max_err}"

    print("KERNEL_OK")
</pallas_src>

<mosaic_0001>
module attributes {stable_mosaic.version = 11 : i64} {
  func.func @_quantized_add_kernel(%arg0: i32, %arg1: memref<16x128xf32, #tpu.memory_space<vmem>>, %arg2: memref<16x128xf32, #tpu.memory_space<vmem>>, %arg3: memref<16x128xf32, #tpu.memory_space<vmem>>) attributes {dimension_semantics = [#tpu.dimension_semantics<parallel>], iteration_bounds = array<i64: 1>, scalar_prefetch = 0 : i64, scratch_operands = 0 : i64, tpu.core_type = #tpu.core_type<tc>, window_params = [{transform_indices = @transform_0, window_bounds = array<i64: 16, 128>}, {transform_indices = @transform_1, window_bounds = array<i64: 16, 128>}, {transform_indices = @transform_2, window_bounds = array<i64: 16, 128>}]} {
    %c0 = arith.constant 0 : index
    %c0_0 = arith.constant 0 : index
    %0 = vector.load %arg1[%c0, %c0_0] : memref<16x128xf32, #tpu.memory_space<vmem>>, vector<16x128xf32>
    %c0_1 = arith.constant 0 : index
    %c0_2 = arith.constant 0 : index
    %1 = vector.load %arg2[%c0_1, %c0_2] : memref<16x128xf32, #tpu.memory_space<vmem>>, vector<16x128xf32>
    %cst = arith.constant 2.000000e+01 : f32
    %2 = vector.broadcast %cst : f32 to vector<16x128xf32>
    %3 = arith.mulf %0, %2 : vector<16x128xf32>
    %4 = math.roundeven %3 : vector<16x128xf32>
    %cst_3 = arith.constant -1.280000e+02 : f32
    %cst_4 = arith.constant 1.270000e+02 : f32
    %5 = vector.broadcast %cst_3 : f32 to vector<16x128xf32>
    %6 = arith.maximumf %5, %4 : vector<16x128xf32>
    %7 = vector.broadcast %cst_4 : f32 to vector<16x128xf32>
    %8 = arith.minimumf %7, %6 : vector<16x128xf32>
    %cst_5 = arith.constant 2.500000e+01 : f32
    %9 = vector.broadcast %cst_5 : f32 to vector<16x128xf32>
    %10 = arith.mulf %1, %9 : vector<16x128xf32>
    %11 = math.roundeven %10 : vector<16x128xf32>
    %cst_6 = arith.constant -1.200000e+02 : f32
    %cst_7 = arith.constant 1.350000e+02 : f32
    %12 = vector.broadcast %cst_6 : f32 to vector<16x128xf32>
    %13 = arith.maximumf %12, %11 : vector<16x128xf32>
    %14 = vector.broadcast %cst_7 : f32 to vector<16x128xf32>
    %15 = arith.minimumf %14, %13 : vector<16x128xf32>
    %cst_8 = arith.constant 6.250000e-01 : f32
    %16 = vector.broadcast %cst_8 : f32 to vector<16x128xf32>
    %17 = arith.mulf %8, %16 : vector<16x128xf32>
    %cst_9 = arith.constant 5.000000e-01 : f32
    %18 = vector.broadcast %cst_9 : f32 to vector<16x128xf32>
    %19 = arith.mulf %15, %18 : vector<16x128xf32>
    %20 = arith.addf %17, %19 : vector<16x128xf32>
    %21 = math.roundeven %20 : vector<16x128xf32>
    %cst_10 = arith.constant -1.270000e+02 : f32
    %cst_11 = arith.constant 1.280000e+02 : f32
    %22 = vector.broadcast %cst_10 : f32 to vector<16x128xf32>
    %23 = arith.maximumf %22, %21 : vector<16x128xf32>
    %24 = vector.broadcast %cst_11 : f32 to vector<16x128xf32>
    %25 = arith.minimumf %24, %23 : vector<16x128xf32>
    %cst_12 = arith.constant 8.000000e-02 : f32
    %26 = vector.broadcast %cst_12 : f32 to vector<16x128xf32>
    %27 = arith.mulf %25, %26 : vector<16x128xf32>
    %c0_13 = arith.constant 0 : index
    %c0_14 = arith.constant 0 : index
    %28 = vector.load %arg3[%c0_13, %c0_14] : memref<16x128xf32, #tpu.memory_space<vmem>>, vector<16x128xf32>
    tpu.vector_store %arg3[%c0_13, %c0_14], %27 {strides = array<i32>} : memref<16x128xf32, #tpu.memory_space<vmem>>, vector<16x128xf32>,
    return
  }
  func.func @transform_0(%arg0: i32) -> (i32, i32) {
    %c0_i32 = arith.constant 0 : i32
    %c0_i32_0 = arith.constant 0 : i32
    return %arg0, %c0_i32 : i32, i32
  }
  func.func @transform_1(%arg0: i32) -> (i32, i32) {
    %c0_i32 = arith.constant 0 : i32
    %c0_i32_0 = arith.constant 0 : i32
    return %arg0, %c0_i32 : i32, i32
  }
  func.func @transform_2(%arg0: i32) -> (i32, i32) {
    %c0_i32 = arith.constant 0 : i32
    %c0_i32_0 = arith.constant 0 : i32
    return %arg0, %c0_i32 : i32, i32
  }
}

</mosaic_0001>

<llo_original>
// kernel: tpu_custom_call.1
$region0: #{tpu_custom_call.1}
  #allocation0 [shape = 'u32[]', space=smem, size = 0x4, offset = 0x4, fixed_abs, tag = 'smem constant byte address 0x4 - core index']
  #allocation1 [shape = 'u32[144,128]{1,0:T(1,128)}', space=vmem, size = 0x12000, scoped, tag = 'internal scratch']
  %s0 = inlined_call_operand.hbm [shape: f32[16,128], index: 0, kind: input, shape index: {}]
  %s1 = inlined_call_operand.hbm [shape: f32[16,128], index: 1, kind: input, shape index: {}]
  %s2 = inlined_call_operand.hbm [shape: f32[16,128], index: 2, kind: output, shape index: {}]
  %s3 = sld [smem:[#allocation0]]
  $region26: #{tpu_custom_call.1} parent=0
    _
  %s5 = ssub.s32 1, %s3
  %s6 = scalar_select 0, %s5, %s3
  $region1: #{tpu_custom_call.1} parent=0
    #allocation2 [shape = 'u8[8192]{0}', space=vmem, size = 0x2000, scoped, tag = 'input window, operand 0, single buffered']
    #allocation3 [shape = 's32[1]{0}', space=sflag, size = 0x4, scoped, tag = 'scoped memory for tpu_custom_call.1']
    #allocation4 [shape = 's32[1]{0}', space=sflag, size = 0x4, scoped, tag = 'scoped memory for tpu_custom_call.1']
    #allocation5 [shape = 'u8[8192]{0}', space=vmem, size = 0x2000, scoped, tag = 'input window, operand 1, single buffered']
    #allocation6 [shape = 's32[1]{0}', space=sflag, size = 0x4, scoped, tag = 'scoped memory for tpu_custom_call.1']
    #allocation7 [shape = 'u8[8192]{0}', space=vmem, size = 0x2000, scoped, tag = 'output window, operand 0, single buffered']
    %7 = vsyncpa [#allocation3], 0
    %8 = vsyncpa [#allocation6], 0
    %9 = vsyncpa [#allocation4], 0
    // Predicated region
    $region2: #{tpu_custom_call.1} parent=1 // pred_check
      _
    $region3: #{tpu_custom_call.1} parent=1 // pred_check_branch
      %11 = sbr.rel (0) target = $region5
    $region4: #{tpu_custom_call.1} parent=1 // pred_region
      %s13 = ssub.s32 256, 256
      %14 = vsyncadd [#allocation3], %s13
      %s15 = sshll.u32 [#allocation2], 4
      %s16 = int_to_ptr.vmem [resolvable:$true] %s15
      %21 = dma.hbm_to_vmem [thread:$0]  %s0, 256, %s16, [#allocation3], 128, 128, 8
    $region5: #{tpu_custom_call.1} parent=1 // pred_fallthru
      _
    // Predicated region
    $region6: #{tpu_custom_call.1} parent=1 // pred_check
      _
    $region7: #{tpu_custom_call.1} parent=1 // pred_check_branch
      %23 = sbr.rel (0) target = $region9
    $region8: #{tpu_custom_call.1} parent=1 // pred_region
      %s25 = ssub.s32 256, 256
      %26 = vsyncadd [#allocation6], %s25
      %s27 = sshll.u32 [#allocation5], 4
      %s28 = int_to_ptr.vmem [resolvable:$true] %s27
      %33 = dma.hbm_to_vmem [thread:$0]  %s1, 256, %s28, [#allocation6], 128, 128, 8
    $region9: #{tpu_custom_call.1} parent=1 // pred_fallthru
      _
    // Predicated region
    $region10: #{tpu_custom_call.1} parent=1 // pred_check
      _
    $region11: #{tpu_custom_call.1} parent=1 // pred_check_branch
      %35 = sbr.rel (0) target = $region13
    $region12: #{tpu_custom_call.1} parent=1 // pred_region
      %36 = dma.done [#allocation3], 256
    $region13: #{tpu_custom_call.1} parent=1 // pred_fallthru
      _
    // Predicated region
    $region14: #{tpu_custom_call.1} parent=1 // pred_check
      _
    $region15: #{tpu_custom_call.1} parent=1 // pred_check_branch
      %38 = sbr.rel (0) target = $region17
    $region16: #{tpu_custom_call.1} parent=1 // pred_region
      %39 = dma.done [#allocation6], 256
    $region17: #{tpu_custom_call.1} parent=1 // pred_fallthru
      _
    %v40 = vld [vmem:[#allocation2] sm:$0xff]
    %v41 = vld [vmem:[#allocation2 + $0x8] sm:$0xff]
    %v42 = vld [vmem:[#allocation5] sm:$0xff]
    %v43 = vld [vmem:[#allocation5 + $0x8] sm:$0xff]
    %v44 = vmul.f32 %v40, 20.0
    %v45 = vmul.f32 %v41, 20.0
    %v46 = vround.ne.pseudo %v44
    %v47 = vround.ne.pseudo %v45
    %v48 = vmax.f32 %v46, -128.0
    %v49 = vmax.f32 %v47, -128.0
    %v50 = vmin.f32 %v48, 127.0
    %v51 = vmin.f32 %v49, 127.0
    %v52 = vmul.f32 %v42, 25.0
    %v53 = vmul.f32 %v43, 25.0
    %v54 = vround.ne.pseudo %v52
    %v55 = vround.ne.pseudo %v53
    %v56 = vmax.f32 %v54, -120.0
    %v57 = vmax.f32 %v55, -120.0
    %v58 = vmin.f32 %v56, 135.0
    %v59 = vmin.f32 %v57, 135.0
    %v60 = vmul.f32 %v50, 0.625
    %v61 = vmul.f32 %v51, 0.625
    %v62 = vmul.f32 %v58, 0.5
    %v63 = vmul.f32 %v59, 0.5
    %v64 = vadd.f32 %v60, %v62
    %v65 = vadd.f32 %v61, %v63
    %v66 = vround.ne.pseudo %v64
    %v67 = vround.ne.pseudo %v65
    %v68 = vmax.f32 %v66, -127.0
    %v69 = vmax.f32 %v67, -127.0
    %v70 = vmin.f32 %v68, 128.0
    %v71 = vmin.f32 %v69, 128.0
    %v72 = vmul.f32 %v70, 0.08
    %v73 = vmul.f32 %v71, 0.08
    %74 = vst [vmem:[#allocation7] sm:$0xff] %v72
    %75 = vst [vmem:[#allocation7 + $0x8] sm:$0xff] %v73
    // Predicated region
    $region18: #{tpu_custom_call.1} parent=1 // pred_check
      _
    $region19: #{tpu_custom_call.1} parent=1 // pred_check_branch
      %77 = sbr.rel (0) target = $region21
    $region20: #{tpu_custom_call.1} parent=1 // pred_region
      %s79 = ssub.s32 256, 256
      %80 = vsyncadd [#allocation4], %s79
      %s81 = sshll.u32 [#allocation7], 4
      %s82 = int_to_ptr.vmem [resolvable:$true] %s81
      %87 = dma.vmem_to_hbm [thread:$0]  %s82, 256, %s2, [#allocation4], 128, 128, 8
    $region21: #{tpu_custom_call.1} parent=1 // pred_fallthru
      _
    // Predicated region
    $region22: #{tpu_custom_call.1} parent=1 // pred_check
      _
    $region23: #{tpu_custom_call.1} parent=1 // pred_check_branch
      %89 = sbr.rel (0) target = $region25
    $region24: #{tpu_custom_call.1} parent=1 // pred_region
      %90 = dma.done [#allocation4], 256
    $region25: #{tpu_custom_call.1} parent=1 // pred_fallthru
      _
    %91 = vsyncpa [#allocation3], 1
    %92 = vsyncpa [#allocation6], 1
    %93 = vsyncpa [#allocation4], 1

</llo_original>
